<compile_context>
chip_gen: v5e
topology: v5e:2x2
jax: 0.10.0
libtpu: 0.0.40
codegen_flags: <defaults>
</compile_context>

<pallas_src>
import jax
import jax.numpy as jnp
from jax import lax
from jax.experimental import pallas as pl
from jax.experimental.pallas import tpu as pltpu


# ----------------------------------------------------------------------------
# Pallas kernel: full fused nSGC forward (training branch)
# ----------------------------------------------------------------------------
def nsgc_kernel(
    # scalar-prefetch refs (SMEM)
    d_idx_ref,   # [P] int32  disease node index per pair
    m_idx_ref,   # [P] int32  mirna node index per pair
    # VMEM inputs (lane-padded, bf16 where they feed the MXU)
    d_sim_ref,   # [num_d, DdP] bf16  d_sim rows of the disease nodes
    m_sim_ref,   # [num_m, DmP] bf16  m_sim rows of the mirna nodes
    wd_ref,      # [DdP, HP]   bf16   d_fc weight (no bias), stored [in, out]
    wm_ref,      # [DmP, HP]   bf16   m_fc weight (no bias), stored [in, out]
    a_ref,       # [N, N]      bf16   symmetric-normalized adjacency
    wf2_ref,     # [K+1, HP, OP] bf16 f_fc2 weight, one slice per prop step
    bf2_ref,     # [1, OP]     f32    f_fc2 bias (zero-padded lanes)
    wp_ref,      # [3, 1, OP]  f32    predict_addcross weight (h_d/h_m/h_cross)
    # SMEM input
    bp_ref,      # [1, 1]      f32    predict_addcross bias (scalar)
    # output
    out_ref,     # [P, 1]      f32    sigmoid scores
    # scratch
    h_sc,        # VMEM [N, OP] f32   fused f_fc2 output (ref needed for gather)
):
    K = wf2_ref.shape[0] - 1
    P = out_ref.shape[0]

    # --- feature projection, split by node type (bf16 MXU, f32 acc) ----------
    z_d = jnp.dot(d_sim_ref[...], wd_ref[...],
                  preferred_element_type=jnp.float32)        # [num_d, HP]
    z_m = jnp.dot(m_sim_ref[...], wm_ref[...],
                  preferred_element_type=jnp.float32)        # [num_m, HP]
    x = jnp.concatenate([z_d, z_m], axis=0).astype(jnp.bfloat16)  # [N, HP] bf16

    # --- K-step normalized propagation with f_fc2 fused as an accumulator ----
    # h = concat([x_0, A x_0, ..., A^K x_0]) @ W_f2 + b
    #   = sum_k x_k @ W_f2[k]   with x_0 = z, x_k = A x_{k-1}
    a = a_ref[...]                                           # [N, N] bf16
    h = jnp.dot(x, wf2_ref[0],
                preferred_element_type=jnp.float32) + bf2_ref[...]
    for k in range(1, K + 1):                                # static -> unrolled
        x = jnp.dot(a, x,                                    # bf16 x bf16, f32 acc
                    preferred_element_type=jnp.float32).astype(jnp.bfloat16)
        h = h + jnp.dot(x, wf2_ref[k], preferred_element_type=jnp.float32)
    h_sc[...] = h

    # --- predict_addcross fused into the per-pair gather ---------------------
    # Indices live in SMEM via scalar prefetch; h rows are dynamic sublane
    # slices of the h scratch.  No [P, O] staging buffers, no concat, no
    # 1-wide matvec.  (Indices are assumed in-range: VMEM OOB reads are silent.)
    w_d = wp_ref[0]                                          # [1, OP] f32
    w_m = wp_ref[1]
    w_x = wp_ref[2]
    bp = bp_ref[0, 0]                                        # scalar

    def pair_body(p, carry):
        di = d_idx_ref[p]
        mi = m_idx_ref[p]
        hd = h_sc[pl.ds(di, 1), :]                           # [1, OP]
        hm = h_sc[pl.ds(mi, 1), :]
        logit = jnp.sum(hd * w_d + hm * w_m + (hd * hm) * w_x,
                        axis=-1, keepdims=True) + bp         # [1, 1]
        out_ref[pl.ds(p, 1), :] = jax.nn.sigmoid(logit)
        return carry

    lax.fori_loop(0, P, pair_body, 0, unroll=True)


# ----------------------------------------------------------------------------
# Wrapper
# ----------------------------------------------------------------------------
def _pad_to(x, shape):
    pads = [(0, t - s) for s, t in zip(x.shape, shape)]
    return jnp.pad(x, pads)


def nsgc_forward(d_sim_d, m_sim_m, W_d, W_m, A_norm,
                 W_f2, b_f2, W_pred, b_pred, diseases, mirnas, *, K):
    N = A_norm.shape[0]
    H = W_d.shape[1]
    O = b_f2.shape[1]
    P = diseases.shape[0]
    Dd = d_sim_d.shape[1]
    Dm = m_sim_m.shape[1]
    assert W_f2.shape == (H * (K + 1), O)
    assert W_pred.shape == (3 * O, 1)

    LANE = 128
    HP = -(-H // LANE) * LANE
    OP = -(-O // LANE) * LANE
    DdP = -(-Dd // LANE) * LANE
    DmP = -(-Dm // LANE) * LANE

    # Layout plumbing only (zero padding to lane-dense shapes + bf16 storage);
    # padded lanes are zero everywhere so logits are unchanged.
    d_sim_p = _pad_to(d_sim_d, (d_sim_d.shape[0], DdP)).astype(jnp.bfloat16)
    m_sim_p = _pad_to(m_sim_m, (m_sim_m.shape[0], DmP)).astype(jnp.bfloat16)
    W_d_p = _pad_to(W_d, (DdP, HP)).astype(jnp.bfloat16)
    W_m_p = _pad_to(W_m, (DmP, HP)).astype(jnp.bfloat16)
    A_bf16 = A_norm.astype(jnp.bfloat16)
    W_f2_r = _pad_to(W_f2.reshape(K + 1, H, O), (K + 1, HP, OP)).astype(jnp.bfloat16)
    b_f2_p = _pad_to(b_f2, (1, OP)).astype(jnp.float32)
    W_pred_r = _pad_to(W_pred.reshape(3, O, 1).transpose(0, 2, 1),
                       (3, 1, OP)).astype(jnp.float32)
    b_pred = b_pred.astype(jnp.float32).reshape(1, 1)
    diseases = diseases.astype(jnp.int32)
    mirnas = mirnas.astype(jnp.int32)

    grid_spec = pltpu.PrefetchScalarGridSpec(
        num_scalar_prefetch=2,
        grid=(1,),
        in_specs=[
            pl.BlockSpec(d_sim_p.shape, lambda i, d, m: (0, 0)),
            pl.BlockSpec(m_sim_p.shape, lambda i, d, m: (0, 0)),
            pl.BlockSpec(W_d_p.shape, lambda i, d, m: (0, 0)),
            pl.BlockSpec(W_m_p.shape, lambda i, d, m: (0, 0)),
            pl.BlockSpec(A_bf16.shape, lambda i, d, m: (0, 0)),
            pl.BlockSpec(W_f2_r.shape, lambda i, d, m: (0, 0, 0)),
            pl.BlockSpec(b_f2_p.shape, lambda i, d, m: (0, 0)),
            pl.BlockSpec(W_pred_r.shape, lambda i, d, m: (0, 0, 0)),
            pl.BlockSpec(memory_space=pltpu.MemorySpace.SMEM),   # b_pred scalar
        ],
        out_specs=pl.BlockSpec((P, 1), lambda i, d, m: (0, 0)),
        scratch_shapes=[
            pltpu.VMEM((N, OP), jnp.float32),   # h (fused f_fc2 output)
        ],
    )

    return pl.pallas_call(
        nsgc_kernel,
        out_shape=jax.ShapeDtypeStruct((P, 1), jnp.float32),
        grid_spec=grid_spec,
        compiler_params=pltpu.CompilerParams(
            dimension_semantics=("arbitrary",),
            vmem_limit_bytes=32 * 1024 * 1024,
        ),
    )(diseases, mirnas, d_sim_p, m_sim_p, W_d_p, W_m_p, A_bf16,
      W_f2_r, b_f2_p, W_pred_r, b_pred)


# ----------------------------------------------------------------------------
# Pure-JAX reference (mirrors the kernel's bf16 storage of A / x_k / weights)
# ----------------------------------------------------------------------------
def nsgc_reference(d_sim_d, m_sim_m, W_d, W_m, A_norm, W_f2, b_f2,
                   W_pred, b_pred, diseases, mirnas, *, K):
    def q(v):  # bf16 round-trip, matching what the kernel stores in bf16
        return v.astype(jnp.bfloat16).astype(jnp.float32)

    z = jnp.concatenate([q(d_sim_d) @ q(W_d), q(m_sim_m) @ q(W_m)], axis=0)
    a = q(A_norm)
    x = q(z)
    parts = [x]
    for _ in range(K):
        x = q(a @ x)
        parts.append(x)
    y = jnp.concatenate(parts, axis=1)
    h = y @ q(W_f2) + b_f2
    h_d = h[diseases]
    h_m = h[mirnas]
    h_edge = jnp.concatenate([h_d, h_m, h_d * h_m], axis=1)
    return jax.nn.sigmoid(h_edge @ W_pred + b_pred)


# ----------------------------------------------------------------------------
# Example / driver
# ----------------------------------------------------------------------------
if __name__ == "__main__":
    num_diseases, num_mirnas = 8, 8
    N = num_diseases + num_mirnas
    d_sim_dim, m_sim_dim = 12, 10
    K = 3
    hid_dim = 24                       # hid_dim * (K+1) must equal out_dim * K
    out_dim = hid_dim * (K + 1) // K   # = 32
    P = 6                              # number of (disease, mirna) pairs scored

    key = jax.random.PRNGKey(0)
    keys = jax.random.split(key, 9)

    # --- node features (G.ndata['d_sim'], G.ndata['m_sim']) ------------------
    # nodes 0..7 are diseases (type==1), nodes 8..15 are mirnas (type==0)
    d_sim = jax.random.normal(keys[0], (N, d_sim_dim), jnp.float32)
    m_sim = jax.random.normal(keys[1], (N, m_sim_dim), jnp.float32)
    d_sim_d = d_sim[:num_diseases]     # rows actually used by d_fc
    m_sim_m = m_sim[num_diseases:]     # rows actually used by m_fc

    # --- deterministic parameters (shapes from nSGC.__init__), stored [in, out]
    W_d = 0.1 * jax.random.normal(keys[2], (d_sim_dim, hid_dim), jnp.float32)
    W_m = 0.1 * jax.random.normal(keys[3], (m_sim_dim, hid_dim), jnp.float32)
    W_f2 = 0.1 * jax.random.normal(keys[4], (hid_dim * (K + 1), out_dim), jnp.float32)
    b_f2 = 0.01 * jnp.ones((1, out_dim), jnp.float32)
    W_pred = 0.1 * jax.random.normal(keys[5], (3 * out_dim, 1), jnp.float32)
    b_pred = jnp.zeros((1, 1), jnp.float32)

    # --- graph: random adjacency (with self-loops so every in-degree >= 1) ---
    adj = jax.random.bernoulli(keys[6], 0.3, (N, N))
    adj = jnp.logical_or(adj, jnp.eye(N, dtype=bool)).astype(jnp.float32)  # M[s, d]
    # pretreatment(): deg = in-degree (over col), w_e = deg^-0.5[row] * deg^-0.5[col]
    in_deg = adj.sum(axis=0)
    dinv = in_deg ** -0.5
    # MessagePassing sum-aggregate: x_out[i] = sum_j M[j, i] * dinv[j] * dinv[i] * x[j]
    A_norm = (dinv[:, None] * dinv[None, :]) * adj.T          # x_out = A_norm @ x

    # --- (disease, mirna) pairs to score -------------------------------------
    diseases = jax.random.randint(keys[7], (P,), 0, num_diseases, dtype=jnp.int32)
    mirnas = jax.random.randint(keys[8], (P,), num_diseases, N, dtype=jnp.int32)

    scores = nsgc_forward(d_sim_d, m_sim_m, W_d, W_m, A_norm,
                          W_f2, b_f2, W_pred, b_pred, diseases, mirnas, K=K)
    scores = jax.block_until_ready(scores)

    assert scores.shape == (P, 1)
    assert bool(jnp.all(jnp.isfinite(scores)))

    ref = nsgc_reference(d_sim_d, m_sim_m, W_d, W_m, A_norm, W_f2, b_f2,
                         W_pred, b_pred, diseases, mirnas, K=K)
    assert bool(jnp.allclose(scores, ref, atol=2e-2, rtol=0.0))
    print("KERNEL_OK")
</pallas_src>

<mosaic_0001>
module attributes {stable_mosaic.version = 11 : i64} {
  func.func @nsgc_kernel(%arg0: i32, %arg1: memref<6xi32, #tpu.memory_space<smem>>, %arg2: memref<6xi32, #tpu.memory_space<smem>>, %arg3: memref<8x128xbf16, #tpu.memory_space<vmem>>, %arg4: memref<8x128xbf16, #tpu.memory_space<vmem>>, %arg5: memref<128x128xbf16, #tpu.memory_space<vmem>>, %arg6: memref<128x128xbf16, #tpu.memory_space<vmem>>, %arg7: memref<16x16xbf16, #tpu.memory_space<vmem>>, %arg8: memref<4x128x128xbf16, #tpu.memory_space<vmem>>, %arg9: memref<1x128xf32, #tpu.memory_space<vmem>>, %arg10: memref<3x1x128xf32, #tpu.memory_space<vmem>>, %arg11: memref<1x1xf32, #tpu.memory_space<smem>>, %arg12: memref<6x1xf32, #tpu.memory_space<vmem>>, %arg13: memref<16x128xf32, #tpu.memory_space<vmem>>) attributes {dimension_semantics = [#tpu.dimension_semantics<arbitrary>], iteration_bounds = array<i64: 1>, scalar_prefetch = 2 : i64, scratch_operands = 1 : i64, tpu.core_type = #tpu.core_type<tc>, window_params = [{pipeline_mode = #tpu.pipeline_mode<synchronous>, transform_indices = @transform_0, window_bounds = array<i64: 8, 128>}, {pipeline_mode = #tpu.pipeline_mode<synchronous>, transform_indices = @transform_1, window_bounds = array<i64: 8, 128>}, {pipeline_mode = #tpu.pipeline_mode<synchronous>, transform_indices = @transform_2, window_bounds = array<i64: 128, 128>}, {pipeline_mode = #tpu.pipeline_mode<synchronous>, transform_indices = @transform_3, window_bounds = array<i64: 128, 128>}, {pipeline_mode = #tpu.pipeline_mode<synchronous>, transform_indices = @transform_4, window_bounds = array<i64: 16, 16>}, {pipeline_mode = #tpu.pipeline_mode<synchronous>, transform_indices = @transform_5, window_bounds = array<i64: 4, 128, 128>}, {pipeline_mode = #tpu.pipeline_mode<synchronous>, transform_indices = @transform_6, window_bounds = array<i64: 1, 128>}, {pipeline_mode = #tpu.pipeline_mode<synchronous>, transform_indices = @transform_7, window_bounds = array<i64: 3, 1, 128>}, {transform_indices = @transform_8, window_bounds = array<i64: 1, 1>}, {pipeline_mode = #tpu.pipeline_mode<synchronous>, transform_indices = @transform_9, window_bounds = array<i64: 6, 1>}]} {
    %c0 = arith.constant 0 : index
    %c0_0 = arith.constant 0 : index
    %0 = vector.load %arg3[%c0, %c0_0] : memref<8x128xbf16, #tpu.memory_space<vmem>>, vector<8x128xbf16>
    %c0_1 = arith.constant 0 : index
    %c0_2 = arith.constant 0 : index
    %1 = vector.load %arg5[%c0_1, %c0_2] : memref<128x128xbf16, #tpu.memory_space<vmem>>, vector<128x128xbf16>
    %cst = arith.constant dense<0.000000e+00> : vector<8x128xf32>
    %2 = tpu.matmul %0, %1, %cst {dimension_numbers = #tpu.dot_dimension_numbers<[1], [0], [0], [1], [0, 0, 1, 1], [], []>} : vector<8x128xbf16>, vector<128x128xbf16>, vector<8x128xf32> -> vector<8x128xf32>
    %c0_3 = arith.constant 0 : index
    %c0_4 = arith.constant 0 : index
    %3 = vector.load %arg4[%c0_3, %c0_4] : memref<8x128xbf16, #tpu.memory_space<vmem>>, vector<8x128xbf16>
    %c0_5 = arith.constant 0 : index
    %c0_6 = arith.constant 0 : index
    %4 = vector.load %arg6[%c0_5, %c0_6] : memref<128x128xbf16, #tpu.memory_space<vmem>>, vector<128x128xbf16>
    %cst_7 = arith.constant dense<0.000000e+00> : vector<8x128xf32>
    %5 = tpu.matmul %3, %4, %cst_7 {dimension_numbers = #tpu.dot_dimension_numbers<[1], [0], [0], [1], [0, 0, 1, 1], [], []>} : vector<8x128xbf16>, vector<128x128xbf16>, vector<8x128xf32> -> vector<8x128xf32>
    %6 = tpu.concatenate %2, %5 in 0 : vector<8x128xf32>, vector<8x128xf32> -> vector<16x128xf32>
    %7 = arith.truncf %6 : vector<16x128xf32> to vector<16x128xbf16>
    %c0_8 = arith.constant 0 : index
    %c0_9 = arith.constant 0 : index
    %8 = vector.load %arg7[%c0_8, %c0_9] : memref<16x16xbf16, #tpu.memory_space<vmem>>, vector<16x16xbf16>
    %c0_10 = arith.constant 0 : index
    %c0_11 = arith.constant 0 : index
    %c0_12 = arith.constant 0 : index
    %9 = vector.load %arg8[%c0_10, %c0_11, %c0_12] : memref<4x128x128xbf16, #tpu.memory_space<vmem>>, vector<1x128x128xbf16>
    %10 = vector.shape_cast %9 : vector<1x128x128xbf16> to vector<128x128xbf16>
    %cst_13 = arith.constant dense<0.000000e+00> : vector<16x128xf32>
    %11 = tpu.matmul %7, %10, %cst_13 {dimension_numbers = #tpu.dot_dimension_numbers<[1], [0], [0], [1], [0, 0, 1, 1], [], []>} : vector<16x128xbf16>, vector<128x128xbf16>, vector<16x128xf32> -> vector<16x128xf32>
    %c0_14 = arith.constant 0 : index
    %c0_15 = arith.constant 0 : index
    %12 = vector.load %arg9[%c0_14, %c0_15] : memref<1x128xf32, #tpu.memory_space<vmem>>, vector<1x128xf32>
    %13 = vector.broadcast %12 : vector<1x128xf32> to vector<16x128xf32>
    %14 = arith.addf %11, %13 : vector<16x128xf32>
    %cst_16 = arith.constant dense<0.000000e+00> : vector<16x128xf32>
    %15 = tpu.matmul %8, %7, %cst_16 {dimension_numbers = #tpu.dot_dimension_numbers<[1], [0], [0], [1], [0, 0, 1, 1], [], []>} : vector<16x16xbf16>, vector<16x128xbf16>, vector<16x128xf32> -> vector<16x128xf32>
    %16 = arith.truncf %15 : vector<16x128xf32> to vector<16x128xbf16>
    %c1 = arith.constant 1 : index
    %c0_17 = arith.constant 0 : index
    %c0_18 = arith.constant 0 : index
    %17 = vector.load %arg8[%c1, %c0_17, %c0_18] : memref<4x128x128xbf16, #tpu.memory_space<vmem>>, vector<1x128x128xbf16>
    %18 = vector.shape_cast %17 : vector<1x128x128xbf16> to vector<128x128xbf16>
    %cst_19 = arith.constant dense<0.000000e+00> : vector<16x128xf32>
    %19 = tpu.matmul %16, %18, %cst_19 {dimension_numbers = #tpu.dot_dimension_numbers<[1], [0], [0], [1], [0, 0, 1, 1], [], []>} : vector<16x128xbf16>, vector<128x128xbf16>, vector<16x128xf32> -> vector<16x128xf32>
    %20 = arith.addf %14, %19 : vector<16x128xf32>
    %cst_20 = arith.constant dense<0.000000e+00> : vector<16x128xf32>
    %21 = tpu.matmul %8, %16, %cst_20 {dimension_numbers = #tpu.dot_dimension_numbers<[1], [0], [0], [1], [0, 0, 1, 1], [], []>} : vector<16x16xbf16>, vector<16x128xbf16>, vector<16x128xf32> -> vector<16x128xf32>
    %22 = arith.truncf %21 : vector<16x128xf32> to vector<16x128xbf16>
    %c2 = arith.constant 2 : index
    %c0_21 = arith.constant 0 : index
    %c0_22 = arith.constant 0 : index
    %23 = vector.load %arg8[%c2, %c0_21, %c0_22] : memref<4x128x128xbf16, #tpu.memory_space<vmem>>, vector<1x128x128xbf16>
    %24 = vector.shape_cast %23 : vector<1x128x128xbf16> to vector<128x128xbf16>
    %cst_23 = arith.constant dense<0.000000e+00> : vector<16x128xf32>
    %25 = tpu.matmul %22, %24, %cst_23 {dimension_numbers = #tpu.dot_dimension_numbers<[1], [0], [0], [1], [0, 0, 1, 1], [], []>} : vector<16x128xbf16>, vector<128x128xbf16>, vector<16x128xf32> -> vector<16x128xf32>
    %26 = arith.addf %20, %25 : vector<16x128xf32>
    %cst_24 = arith.constant dense<0.000000e+00> : vector<16x128xf32>
    %27 = tpu.matmul %8, %22, %cst_24 {dimension_numbers = #tpu.dot_dimension_numbers<[1], [0], [0], [1], [0, 0, 1, 1], [], []>} : vector<16x16xbf16>, vector<16x128xbf16>, vector<16x128xf32> -> vector<16x128xf32>
    %28 = arith.truncf %27 : vector<16x128xf32> to vector<16x128xbf16>
    %c3 = arith.constant 3 : index
    %c0_25 = arith.constant 0 : index
    %c0_26 = arith.constant 0 : index
    %29 = vector.load %arg8[%c3, %c0_25, %c0_26] : memref<4x128x128xbf16, #tpu.memory_space<vmem>>, vector<1x128x128xbf16>
    %30 = vector.shape_cast %29 : vector<1x128x128xbf16> to vector<128x128xbf16>
    %cst_27 = arith.constant dense<0.000000e+00> : vector<16x128xf32>
    %31 = tpu.matmul %28, %30, %cst_27 {dimension_numbers = #tpu.dot_dimension_numbers<[1], [0], [0], [1], [0, 0, 1, 1], [], []>} : vector<16x128xbf16>, vector<128x128xbf16>, vector<16x128xf32> -> vector<16x128xf32>
    %32 = arith.addf %26, %31 : vector<16x128xf32>
    %c0_28 = arith.constant 0 : index
    %c0_29 = arith.constant 0 : index
    %33 = vector.load %arg13[%c0_28, %c0_29] : memref<16x128xf32, #tpu.memory_space<vmem>>, vector<16x128xf32>
    tpu.vector_store %arg13[%c0_28, %c0_29], %32 {strides = array<i32>} : memref<16x128xf32, #tpu.memory_space<vmem>>, vector<16x128xf32>,
    %c0_30 = arith.constant 0 : index
    %c0_31 = arith.constant 0 : index
    %c0_32 = arith.constant 0 : index
    %34 = vector.load %arg10[%c0_30, %c0_31, %c0_32] : memref<3x1x128xf32, #tpu.memory_space<vmem>>, vector<1x1x128xf32>
    %35 = vector.shape_cast %34 : vector<1x1x128xf32> to vector<1x128xf32>
    %c1_33 = arith.constant 1 : index
    %c0_34 = arith.constant 0 : index
    %c0_35 = arith.constant 0 : index
    %36 = vector.load %arg10[%c1_33, %c0_34, %c0_35] : memref<3x1x128xf32, #tpu.memory_space<vmem>>, vector<1x1x128xf32>
    %37 = vector.shape_cast %36 : vector<1x1x128xf32> to vector<1x128xf32>
    %c2_36 = arith.constant 2 : index
    %c0_37 = arith.constant 0 : index
    %c0_38 = arith.constant 0 : index
    %38 = vector.load %arg10[%c2_36, %c0_37, %c0_38] : memref<3x1x128xf32, #tpu.memory_space<vmem>>, vector<1x1x128xf32>
    %39 = vector.shape_cast %38 : vector<1x1x128xf32> to vector<1x128xf32>
    %c0_39 = arith.constant 0 : index
    %c0_40 = arith.constant 0 : index
    %40 = memref.load %arg11[%c0_39, %c0_40] : memref<1x1xf32, #tpu.memory_space<smem>>
    %c0_i32 = arith.constant 0 : i32
    %41 = arith.index_cast %c0_i32 : i32 to index
    %42 = memref.load %arg1[%41] : memref<6xi32, #tpu.memory_space<smem>>
    %43 = arith.index_cast %c0_i32 : i32 to index
    %44 = memref.load %arg2[%43] : memref<6xi32, #tpu.memory_space<smem>>
    %45 = arith.index_cast %42 : i32 to index
    %c0_41 = arith.constant 0 : index
    %46 = vector.load %arg13[%45, %c0_41] : memref<16x128xf32, #tpu.memory_space<vmem>>, vector<1x128xf32>
    %47 = arith.index_cast %44 : i32 to index
    %c0_42 = arith.constant 0 : index
    %48 = vector.load %arg13[%47, %c0_42] : memref<16x128xf32, #tpu.memory_space<vmem>>, vector<1x128xf32>
    %49 = arith.mulf %46, %35 : vector<1x128xf32>
    %50 = arith.mulf %48, %37 : vector<1x128xf32>
    %51 = arith.addf %49, %50 : vector<1x128xf32>
    %52 = arith.mulf %46, %48 : vector<1x128xf32>
    %53 = arith.mulf %52, %39 : vector<1x128xf32>
    %54 = arith.addf %51, %53 : vector<1x128xf32>
    %cst_43 = arith.constant dense<0.000000e+00> : vector<1xf32>
    %55 = vector.multi_reduction <add>, %54, %cst_43 [1] : vector<1x128xf32> to vector<1xf32>
    %56 = vector.shape_cast %55 : vector<1xf32> to vector<1x1xf32>
    %57 = vector.broadcast %40 : f32 to vector<1x1xf32>
    %58 = arith.addf %56, %57 : vector<1x1xf32>
    %59 = arith.negf %58 : vector<1x1xf32>
    %60 = math.exp %59 : vector<1x1xf32>
    %cst_44 = arith.constant 1.000000e+00 : f32
    %61 = vector.broadcast %cst_44 : f32 to vector<1x1xf32>
    %62 = arith.addf %61, %60 : vector<1x1xf32>
    %63 = arith.divf %61, %62 : vector<1x1xf32>
    %64 = arith.index_cast %c0_i32 : i32 to index
    %c0_45 = arith.constant 0 : index
    %65 = vector.load %arg12[%64, %c0_45] : memref<6x1xf32, #tpu.memory_space<vmem>>, vector<1x1xf32>
    tpu.vector_store %arg12[%64, %c0_45], %63 {strides = array<i32>} : memref<6x1xf32, #tpu.memory_space<vmem>>, vector<1x1xf32>,
    %c1_i32 = arith.constant 1 : i32
    %66 = arith.index_cast %c1_i32 : i32 to index
    %67 = memref.load %arg1[%66] : memref<6xi32, #tpu.memory_space<smem>>
    %68 = arith.index_cast %c1_i32 : i32 to index
    %69 = memref.load %arg2[%68] : memref<6xi32, #tpu.memory_space<smem>>
    %70 = arith.index_cast %67 : i32 to index
    %c0_46 = arith.constant 0 : index
    %71 = vector.load %arg13[%70, %c0_46] : memref<16x128xf32, #tpu.memory_space<vmem>>, vector<1x128xf32>
    %72 = arith.index_cast %69 : i32 to index
    %c0_47 = arith.constant 0 : index
    %73 = vector.load %arg13[%72, %c0_47] : memref<16x128xf32, #tpu.memory_space<vmem>>, vector<1x128xf32>
    %74 = arith.mulf %71, %35 : vector<1x128xf32>
    %75 = arith.mulf %73, %37 : vector<1x128xf32>
    %76 = arith.addf %74, %75 : vector<1x128xf32>
    %77 = arith.mulf %71, %73 : vector<1x128xf32>
    %78 = arith.mulf %77, %39 : vector<1x128xf32>
    %79 = arith.addf %76, %78 : vector<1x128xf32>
    %cst_48 = arith.constant dense<0.000000e+00> : vector<1xf32>
    %80 = vector.multi_reduction <add>, %79, %cst_48 [1] : vector<1x128xf32> to vector<1xf32>
    %81 = vector.shape_cast %80 : vector<1xf32> to vector<1x1xf32>
    %82 = vector.broadcast %40 : f32 to vector<1x1xf32>
    %83 = arith.addf %81, %82 : vector<1x1xf32>
    %84 = arith.negf %83 : vector<1x1xf32>
    %85 = math.exp %84 : vector<1x1xf32>
    %cst_49 = arith.constant 1.000000e+00 : f32
    %86 = vector.broadcast %cst_49 : f32 to vector<1x1xf32>
    %87 = arith.addf %86, %85 : vector<1x1xf32>
    %88 = arith.divf %86, %87 : vector<1x1xf32>
    %89 = arith.index_cast %c1_i32 : i32 to index
    %c0_50 = arith.constant 0 : index
    %90 = vector.load %arg12[%89, %c0_50] : memref<6x1xf32, #tpu.memory_space<vmem>>, vector<1x1xf32>
    tpu.vector_store %arg12[%89, %c0_50], %88 {strides = array<i32>} : memref<6x1xf32, #tpu.memory_space<vmem>>, vector<1x1xf32>,
    %c2_i32 = arith.constant 2 : i32
    %91 = arith.index_cast %c2_i32 : i32 to index
    %92 = memref.load %arg1[%91] : memref<6xi32, #tpu.memory_space<smem>>
    %93 = arith.index_cast %c2_i32 : i32 to index
    %94 = memref.load %arg2[%93] : memref<6xi32, #tpu.memory_space<smem>>
    %95 = arith.index_cast %92 : i32 to index
    %c0_51 = arith.constant 0 : index
    %96 = vector.load %arg13[%95, %c0_51] : memref<16x128xf32, #tpu.memory_space<vmem>>, vector<1x128xf32>
    %97 = arith.index_cast %94 : i32 to index
    %c0_52 = arith.constant 0 : index
    %98 = vector.load %arg13[%97, %c0_52] : memref<16x128xf32, #tpu.memory_space<vmem>>, vector<1x128xf32>
    %99 = arith.mulf %96, %35 : vector<1x128xf32>
    %100 = arith.mulf %98, %37 : vector<1x128xf32>
    %101 = arith.addf %99, %100 : vector<1x128xf32>
    %102 = arith.mulf %96, %98 : vector<1x128xf32>
    %103 = arith.mulf %102, %39 : vector<1x128xf32>
    %104 = arith.addf %101, %103 : vector<1x128xf32>
    %cst_53 = arith.constant dense<0.000000e+00> : vector<1xf32>
    %105 = vector.multi_reduction <add>, %104, %cst_53 [1] : vector<1x128xf32> to vector<1xf32>
    %106 = vector.shape_cast %105 : vector<1xf32> to vector<1x1xf32>
    %107 = vector.broadcast %40 : f32 to vector<1x1xf32>
    %108 = arith.addf %106, %107 : vector<1x1xf32>
    %109 = arith.negf %108 : vector<1x1xf32>
    %110 = math.exp %109 : vector<1x1xf32>
    %cst_54 = arith.constant 1.000000e+00 : f32
    %111 = vector.broadcast %cst_54 : f32 to vector<1x1xf32>
    %112 = arith.addf %111, %110 : vector<1x1xf32>
    %113 = arith.divf %111, %112 : vector<1x1xf32>
    %114 = arith.index_cast %c2_i32 : i32 to index
    %c0_55 = arith.constant 0 : index
    %115 = vector.load %arg12[%114, %c0_55] : memref<6x1xf32, #tpu.memory_space<vmem>>, vector<1x1xf32>
    tpu.vector_store %arg12[%114, %c0_55], %113 {strides = array<i32>} : memref<6x1xf32, #tpu.memory_space<vmem>>, vector<1x1xf32>,
    %c3_i32 = arith.constant 3 : i32
    %116 = arith.index_cast %c3_i32 : i32 to index
    %117 = memref.load %arg1[%116] : memref<6xi32, #tpu.memory_space<smem>>
    %118 = arith.index_cast %c3_i32 : i32 to index
    %119 = memref.load %arg2[%118] : memref<6xi32, #tpu.memory_space<smem>>
    %120 = arith.index_cast %117 : i32 to index
    %c0_56 = arith.constant 0 : index
    %121 = vector.load %arg13[%120, %c0_56] : memref<16x128xf32, #tpu.memory_space<vmem>>, vector<1x128xf32>
    %122 = arith.index_cast %119 : i32 to index
    %c0_57 = arith.constant 0 : index
    %123 = vector.load %arg13[%122, %c0_57] : memref<16x128xf32, #tpu.memory_space<vmem>>, vector<1x128xf32>
    %124 = arith.mulf %121, %35 : vector<1x128xf32>
    %125 = arith.mulf %123, %37 : vector<1x128xf32>
    %126 = arith.addf %124, %125 : vector<1x128xf32>
    %127 = arith.mulf %121, %123 : vector<1x128xf32>
    %128 = arith.mulf %127, %39 : vector<1x128xf32>
    %129 = arith.addf %126, %128 : vector<1x128xf32>
    %cst_58 = arith.constant dense<0.000000e+00> : vector<1xf32>
    %130 = vector.multi_reduction <add>, %129, %cst_58 [1] : vector<1x128xf32> to vector<1xf32>
    %131 = vector.shape_cast %130 : vector<1xf32> to vector<1x1xf32>
    %132 = vector.broadcast %40 : f32 to vector<1x1xf32>
    %133 = arith.addf %131, %132 : vector<1x1xf32>
    %134 = arith.negf %133 : vector<1x1xf32>
    %135 = math.exp %134 : vector<1x1xf32>
    %cst_59 = arith.constant 1.000000e+00 : f32
    %136 = vector.broadcast %cst_59 : f32 to vector<1x1xf32>
    %137 = arith.addf %136, %135 : vector<1x1xf32>
    %138 = arith.divf %136, %137 : vector<1x1xf32>
    %139 = arith.index_cast %c3_i32 : i32 to index
    %c0_60 = arith.constant 0 : index
    %140 = vector.load %arg12[%139, %c0_60] : memref<6x1xf32, #tpu.memory_space<vmem>>, vector<1x1xf32>
    tpu.vector_store %arg12[%139, %c0_60], %138 {strides = array<i32>} : memref<6x1xf32, #tpu.memory_space<vmem>>, vector<1x1xf32>,
    %c4_i32 = arith.constant 4 : i32
    %141 = arith.index_cast %c4_i32 : i32 to index
    %142 = memref.load %arg1[%141] : memref<6xi32, #tpu.memory_space<smem>>
    %143 = arith.index_cast %c4_i32 : i32 to index
    %144 = memref.load %arg2[%143] : memref<6xi32, #tpu.memory_space<smem>>
    %145 = arith.index_cast %142 : i32 to index
    %c0_61 = arith.constant 0 : index
    %146 = vector.load %arg13[%145, %c0_61] : memref<16x128xf32, #tpu.memory_space<vmem>>, vector<1x128xf32>
    %147 = arith.index_cast %144 : i32 to index
    %c0_62 = arith.constant 0 : index
    %148 = vector.load %arg13[%147, %c0_62] : memref<16x128xf32, #tpu.memory_space<vmem>>, vector<1x128xf32>
    %149 = arith.mulf %146, %35 : vector<1x128xf32>
    %150 = arith.mulf %148, %37 : vector<1x128xf32>
    %151 = arith.addf %149, %150 : vector<1x128xf32>
    %152 = arith.mulf %146, %148 : vector<1x128xf32>
    %153 = arith.mulf %152, %39 : vector<1x128xf32>
    %154 = arith.addf %151, %153 : vector<1x128xf32>
    %cst_63 = arith.constant dense<0.000000e+00> : vector<1xf32>
    %155 = vector.multi_reduction <add>, %154, %cst_63 [1] : vector<1x128xf32> to vector<1xf32>
    %156 = vector.shape_cast %155 : vector<1xf32> to vector<1x1xf32>
    %157 = vector.broadcast %40 : f32 to vector<1x1xf32>
    %158 = arith.addf %156, %157 : vector<1x1xf32>
    %159 = arith.negf %158 : vector<1x1xf32>
    %160 = math.exp %159 : vector<1x1xf32>
    %cst_64 = arith.constant 1.000000e+00 : f32
    %161 = vector.broadcast %cst_64 : f32 to vector<1x1xf32>
    %162 = arith.addf %161, %160 : vector<1x1xf32>
    %163 = arith.divf %161, %162 : vector<1x1xf32>
    %164 = arith.index_cast %c4_i32 : i32 to index
    %c0_65 = arith.constant 0 : index
    %165 = vector.load %arg12[%164, %c0_65] : memref<6x1xf32, #tpu.memory_space<vmem>>, vector<1x1xf32>
    tpu.vector_store %arg12[%164, %c0_65], %163 {strides = array<i32>} : memref<6x1xf32, #tpu.memory_space<vmem>>, vector<1x1xf32>,
    %c5_i32 = arith.constant 5 : i32
    %166 = arith.index_cast %c5_i32 : i32 to index
    %167 = memref.load %arg1[%166] : memref<6xi32, #tpu.memory_space<smem>>
    %168 = arith.index_cast %c5_i32 : i32 to index
    %169 = memref.load %arg2[%168] : memref<6xi32, #tpu.memory_space<smem>>
    %170 = arith.index_cast %167 : i32 to index
    %c0_66 = arith.constant 0 : index
    %171 = vector.load %arg13[%170, %c0_66] : memref<16x128xf32, #tpu.memory_space<vmem>>, vector<1x128xf32>
    %172 = arith.index_cast %169 : i32 to index
    %c0_67 = arith.constant 0 : index
    %173 = vector.load %arg13[%172, %c0_67] : memref<16x128xf32, #tpu.memory_space<vmem>>, vector<1x128xf32>
    %174 = arith.mulf %171, %35 : vector<1x128xf32>
    %175 = arith.mulf %173, %37 : vector<1x128xf32>
    %176 = arith.addf %174, %175 : vector<1x128xf32>
    %177 = arith.mulf %171, %173 : vector<1x128xf32>
    %178 = arith.mulf %177, %39 : vector<1x128xf32>
    %179 = arith.addf %176, %178 : vector<1x128xf32>
    %cst_68 = arith.constant dense<0.000000e+00> : vector<1xf32>
    %180 = vector.multi_reduction <add>, %179, %cst_68 [1] : vector<1x128xf32> to vector<1xf32>
    %181 = vector.shape_cast %180 : vector<1xf32> to vector<1x1xf32>
    %182 = vector.broadcast %40 : f32 to vector<1x1xf32>
    %183 = arith.addf %181, %182 : vector<1x1xf32>
    %184 = arith.negf %183 : vector<1x1xf32>
    %185 = math.exp %184 : vector<1x1xf32>
    %cst_69 = arith.constant 1.000000e+00 : f32
    %186 = vector.broadcast %cst_69 : f32 to vector<1x1xf32>
    %187 = arith.addf %186, %185 : vector<1x1xf32>
    %188 = arith.divf %186, %187 : vector<1x1xf32>
    %189 = arith.index_cast %c5_i32 : i32 to index
    %c0_70 = arith.constant 0 : index
    %190 = vector.load %arg12[%189, %c0_70] : memref<6x1xf32, #tpu.memory_space<vmem>>, vector<1x1xf32>
    tpu.vector_store %arg12[%189, %c0_70], %188 {strides = array<i32>} : memref<6x1xf32, #tpu.memory_space<vmem>>, vector<1x1xf32>,
    %c6_i32 = arith.constant 6 : i32
    return
  }
  func.func @transform_0(%arg0: i32, %arg1: memref<6xi32, #tpu.memory_space<smem>>, %arg2: memref<6xi32, #tpu.memory_space<smem>>) -> (i32, i32) {
    %c0_i32 = arith.constant 0 : i32
    %c0_i32_0 = arith.constant 0 : i32
    %c0_i32_1 = arith.constant 0 : i32
    return %c0_i32, %c0_i32_0 : i32, i32
  }
  func.func @transform_1(%arg0: i32, %arg1: memref<6xi32, #tpu.memory_space<smem>>, %arg2: memref<6xi32, #tpu.memory_space<smem>>) -> (i32, i32) {
    %c0_i32 = arith.constant 0 : i32
    %c0_i32_0 = arith.constant 0 : i32
    %c0_i32_1 = arith.constant 0 : i32
    return %c0_i32, %c0_i32_0 : i32, i32
  }
  func.func @transform_2(%arg0: i32, %arg1: memref<6xi32, #tpu.memory_space<smem>>, %arg2: memref<6xi32, #tpu.memory_space<smem>>) -> (i32, i32) {
    %c0_i32 = arith.constant 0 : i32
    %c0_i32_0 = arith.constant 0 : i32
    %c0_i32_1 = arith.constant 0 : i32
    return %c0_i32, %c0_i32_0 : i32, i32
  }
  func.func @transform_3(%arg0: i32, %arg1: memref<6xi32, #tpu.memory_space<smem>>, %arg2: memref<6xi32, #tpu.memory_space<smem>>) -> (i32, i32) {
    %c0_i32 = arith.constant 0 : i32
    %c0_i32_0 = arith.constant 0 : i32
    %c0_i32_1 = arith.constant 0 : i32
    return %c0_i32, %c0_i32_0 : i32, i32
  }
  func.func @transform_4(%arg0: i32, %arg1: memref<6xi32, #tpu.memory_space<smem>>, %arg2: memref<6xi32, #tpu.memory_space<smem>>) -> (i32, i32) {
    %c0_i32 = arith.constant 0 : i32
    %c0_i32_0 = arith.constant 0 : i32
    %c0_i32_1 = arith.constant 0 : i32
    return %c0_i32, %c0_i32_0 : i32, i32
  }
  func.func @transform_5(%arg0: i32, %arg1: memref<6xi32, #tpu.memory_space<smem>>, %arg2: memref<6xi32, #tpu.memory_space<smem>>) -> (i32, i32, i32) {
    %c0_i32 = arith.constant 0 : i32
    %c0_i32_0 = arith.constant 0 : i32
    %c0_i32_1 = arith.constant 0 : i32
    %c0_i32_2 = arith.constant 0 : i32
    return %c0_i32, %c0_i32_0, %c0_i32_1 : i32, i32, i32
  }
  func.func @transform_6(%arg0: i32, %arg1: memref<6xi32, #tpu.memory_space<smem>>, %arg2: memref<6xi32, #tpu.memory_space<smem>>) -> (i32, i32) {
    %c0_i32 = arith.constant 0 : i32
    %c0_i32_0 = arith.constant 0 : i32
    %c0_i32_1 = arith.constant 0 : i32
    return %c0_i32, %c0_i32_0 : i32, i32
  }
  func.func @transform_7(%arg0: i32, %arg1: memref<6xi32, #tpu.memory_space<smem>>, %arg2: memref<6xi32, #tpu.memory_space<smem>>) -> (i32, i32, i32) {
    %c0_i32 = arith.constant 0 : i32
    %c0_i32_0 = arith.constant 0 : i32
    %c0_i32_1 = arith.constant 0 : i32
    %c0_i32_2 = arith.constant 0 : i32
    return %c0_i32, %c0_i32_0, %c0_i32_1 : i32, i32, i32
  }
  func.func @transform_8(%arg0: i32, %arg1: memref<6xi32, #tpu.memory_space<smem>>, %arg2: memref<6xi32, #tpu.memory_space<smem>>) -> (i32, i32) {
    %c0_i32 = arith.constant 0 : i32
    %c0_i32_0 = arith.constant 0 : i32
    %c0_i32_1 = arith.constant 0 : i32
    return %c0_i32, %c0_i32_0 : i32, i32
  }
  func.func @transform_9(%arg0: i32, %arg1: memref<6xi32, #tpu.memory_space<smem>>, %arg2: memref<6xi32, #tpu.memory_space<smem>>) -> (i32, i32) {
    %c0_i32 = arith.constant 0 : i32
    %c0_i32_0 = arith.constant 0 : i32
    %c0_i32_1 = arith.constant 0 : i32
    return %c0_i32, %c0_i32_0 : i32, i32
  }
}

</mosaic_0001>

<llo_original>
// kernel: tpu_custom_call.1
$region0: #{tpu_custom_call.1}
  #allocation0 [shape = 'u32[]', space=smem, size = 0x4, offset = 0x4, fixed_abs, tag = 'smem constant byte address 0x4 - core index']
  #allocation1 [shape = 'u32[72,128]{1,0:T(1,128)}', space=vmem, size = 0x9000, scoped, tag = 'internal scratch']
  #allocation2 [shape = 'f32[16,128]{1,0:T(8,128)}', space=vmem, size = 0x2000, scoped, tag = 'scratch operand']
  #allocation3 [shape = 's32[1]{0}', space=sflag, size = 0x4, scoped, tag = 'scoped memory for tpu_custom_call.1']
  #allocation4 [shape = 'u8[512]{0}', space=smem, size = 0x200, scoped, tag = 'prefetched SMEM operand 0']
  #allocation5 [shape = 'u8[512]{0}', space=smem, size = 0x200, scoped, tag = 'prefetched SMEM operand 1']
  #allocation6 [shape = 'f32[1,1]{1,0:T(1,128)S(6)}', space=smem, size = 0x200, scoped, tag = 'scoped memory for tpu_custom_call.1']
  %s0 = inlined_call_operand.hbm [shape: s32[6], index: 0, kind: input, shape index: {}]
  %s1 = inlined_call_operand.hbm [shape: s32[6], index: 1, kind: input, shape index: {}]
  %s2 = inlined_call_operand.hbm [shape: bf16[8,128], index: 2, kind: input, shape index: {}]
  %s3 = inlined_call_operand.vmem [shape: bf16[8,128], index: 3, kind: input, shape index: {}]
  %s4 = inlined_call_operand.hbm [shape: bf16[128,128], index: 4, kind: input, shape index: {}]
  %s5 = inlined_call_operand.hbm [shape: bf16[128,128], index: 5, kind: input, shape index: {}]
  %s6 = inlined_call_operand.hbm [shape: bf16[16,16], index: 6, kind: input, shape index: {}]
  %s7 = inlined_call_operand.hbm [shape: bf16[4,128,128], index: 7, kind: input, shape index: {}]
  %s8 = inlined_call_operand.vmem [shape: f32[1,128], index: 8, kind: input, shape index: {}]
  %s9 = inlined_call_operand.vmem [shape: f32[3,1,128], index: 9, kind: input, shape index: {}]
  %s10 = inlined_call_operand.<no memory space> [shape: f32[1,1], index: 10, kind: input, shape index: {}]
  %s11 = inlined_call_operand.vmem [shape: f32[6,1], index: 11, kind: output, shape index: {}]
  %s12 = sld [smem:[#allocation0]]
  $region66: #{tpu_custom_call.1} parent=0
    _
  %s14 = ssub.s32 1, %s12
  %s15 = scalar_select 0, %s14, %s12
  %s17 = sshll.u32 %s0, 4
  %s18 = int_to_ptr.hbm [resolvable:$true] %s17
  %20 = dma.hbm_to_smem %s18, 16, [#allocation4], [#allocation3]
  %s22 = sshll.u32 %s1, 4
  %s23 = int_to_ptr.hbm [resolvable:$true] %s22
  %25 = dma.hbm_to_smem %s23, 16, [#allocation5], [#allocation3]
  %26 = sst [smem:[#allocation6]] %s10
  %28 = dma.done [#allocation3], 32
  %29 = sfence
  $region1: #{tpu_custom_call.1} parent=0
    #allocation7 [shape = 'u8[2048]{0}', space=vmem, size = 0x800, scoped, tag = 'input window, operand 2, single buffered']
    #allocation8 [shape = 's32[1]{0}', space=sflag, size = 0x4, scoped, tag = 'scoped memory for tpu_custom_call.1']
    #allocation9 [shape = 'u8[32768]{0}', space=vmem, size = 0x8000, scoped, tag = 'input window, operand 4, single buffered']
    #allocation10 [shape = 's32[1]{0}', space=sflag, size = 0x4, scoped, tag = 'scoped memory for tpu_custom_call.1']
    #allocation11 [shape = 'u8[32768]{0}', space=vmem, size = 0x8000, scoped, tag = 'input window, operand 5, single buffered']
    #allocation12 [shape = 'u8[4096]{0}', space=vmem, size = 0x1000, scoped, tag = 'input window, operand 6, single buffered']
    #allocation13 [shape = 's32[1]{0}', space=sflag, size = 0x4, scoped, tag = 'scoped memory for tpu_custom_call.1']
    #allocation14 [shape = 'u8[131072]{0}', space=vmem, size = 0x20000, scoped, tag = 'input window, operand 7, single buffered']
    %30 = vsyncpa [#allocation8], 0
    %31 = vsyncpa [#allocation10], 0
    %32 = vsyncpa [#allocation13], 0
    // Predicated region
    $region2: #{tpu_custom_call.1} parent=1 // pred_check
      _
    $region3: #{tpu_custom_call.1} parent=1 // pred_check_branch
      %34 = sbr.rel (0) target = $region5
    $region4: #{tpu_custom_call.1} parent=1 // pred_region
      %36 = vsyncadd [#allocation8], 0
      %s38 = sshll.u32 %s2, 4
      %s39 = int_to_ptr.hbm [resolvable:$true] %s38
      %s40 = sshll.u32 [#allocation7], 4
      %s41 = int_to_ptr.vmem [resolvable:$true] %s40
      %43 = dma.hbm_to_vmem [thread:$0]  %s39, 64, %s41, [#allocation8]
    $region5: #{tpu_custom_call.1} parent=1 // pred_fallthru
      _
    // Predicated region
    $region6: #{tpu_custom_call.1} parent=1 // pred_check
      _
    $region7: #{tpu_custom_call.1} parent=1 // pred_check_branch
      %45 = sbr.rel (0) target = $region9
    $region8: #{tpu_custom_call.1} parent=1 // pred_region
      _
    $region9: #{tpu_custom_call.1} parent=1 // pred_fallthru
      _
    // Predicated region
    $region10: #{tpu_custom_call.1} parent=1 // pred_check
      _
    $region11: #{tpu_custom_call.1} parent=1 // pred_check_branch
      %47 = sbr.rel (0) target = $region13
    $region12: #{tpu_custom_call.1} parent=1 // pred_region
      %49 = vsyncadd [#allocation10], 0
      %s50 = sshll.u32 %s4, 4
      %s51 = int_to_ptr.hbm [resolvable:$true] %s50
      %s52 = sshll.u32 [#allocation9], 4
      %s53 = int_to_ptr.vmem [resolvable:$true] %s52
      %58 = dma.hbm_to_vmem [thread:$0]  %s51, 1024, %s53, [#allocation10], 64, 64, 4
    $region13: #{tpu_custom_call.1} parent=1 // pred_fallthru
      _
    // Predicated region
    $region14: #{tpu_custom_call.1} parent=1 // pred_check
      _
    $region15: #{tpu_custom_call.1} parent=1 // pred_check_branch
      %60 = sbr.rel (0) target = $region17
    $region16: #{tpu_custom_call.1} parent=1 // pred_region
      %62 = vsyncadd [#allocation10], 0
      %s63 = sshll.u32 %s5, 4
      %s64 = int_to_ptr.hbm [resolvable:$true] %s63
      %s65 = sshll.u32 [#allocation11], 4
      %s66 = int_to_ptr.vmem [resolvable:$true] %s65
      %71 = dma.hbm_to_vmem [thread:$0]  %s64, 1024, %s66, [#allocation10], 64, 64, 4
    $region17: #{tpu_custom_call.1} parent=1 // pred_fallthru
      _
    // Predicated region
    $region18: #{tpu_custom_call.1} parent=1 // pred_check
      _
    $region19: #{tpu_custom_call.1} parent=1 // pred_check_branch
      %73 = sbr.rel (0) target = $region21
    $region20: #{tpu_custom_call.1} parent=1 // pred_region
      %75 = vsyncadd [#allocation13], 0
      %s76 = sshll.u32 %s6, 4
      %s77 = int_to_ptr.hbm [resolvable:$true] %s76
      %s78 = sshll.u32 [#allocation12], 4
      %s79 = int_to_ptr.vmem [resolvable:$true] %s78
      %84 = dma.hbm_to_vmem [thread:$0]  %s77, 128, %s79, [#allocation13], 64, 64, 4
    $region21: #{tpu_custom_call.1} parent=1 // pred_fallthru
      _
    // Predicated region
    $region22: #{tpu_custom_call.1} parent=1 // pred_check
      _
    $region23: #{tpu_custom_call.1} parent=1 // pred_check_branch
      %86 = sbr.rel (0) target = $region25
    $region24: #{tpu_custom_call.1} parent=1 // pred_region
      %88 = vsyncadd [#allocation13], 0
      %s89 = sshll.u32 %s7, 4
      %s90 = int_to_ptr.hbm [resolvable:$true] %s89
      %s91 = sshll.u32 [#allocation14], 4
      %s92 = int_to_ptr.vmem [resolvable:$true] %s91
      %97 = dma.hbm_to_vmem [thread:$0]  %s90, 4096, %s92, [#allocation13], 64, 64, 4
    $region25: #{tpu_custom_call.1} parent=1 // pred_fallthru
      _
    // Predicated region
    $region26: #{tpu_custom_call.1} parent=1 // pred_check
      _
    $region27: #{tpu_custom_call.1} parent=1 // pred_check_branch
      %99 = sbr.rel (0) target = $region29
    $region28: #{tpu_custom_call.1} parent=1 // pred_region
      _
    $region29: #{tpu_custom_call.1} parent=1 // pred_fallthru
      _
    // Predicated region
    $region30: #{tpu_custom_call.1} parent=1 // pred_check
      _
    $region31: #{tpu_custom_call.1} parent=1 // pred_check_branch
      %101 = sbr.rel (0) target = $region33
    $region32: #{tpu_custom_call.1} parent=1 // pred_region
      _
    $region33: #{tpu_custom_call.1} parent=1 // pred_fallthru
      _
    // Predicated region
    $region34: #{tpu_custom_call.1} parent=1 // pred_check
      _
    $region35: #{tpu_custom_call.1} parent=1 // pred_check_branch
      %103 = sbr.rel (0) target = $region37
    $region36: #{tpu_custom_call.1} parent=1 // pred_region
      _
    $region37: #{tpu_custom_call.1} parent=1 // pred_fallthru
      _
    // Predicated region
    $region38: #{tpu_custom_call.1} parent=1 // pred_check
      _
    $region39: #{tpu_custom_call.1} parent=1 // pred_check_branch
      %105 = sbr.rel (0) target = $region41
    $region40: #{tpu_custom_call.1} parent=1 // pred_region
      %107 = dma.done [#allocation8], 64
    $region41: #{tpu_custom_call.1} parent=1 // pred_fallthru
      _
    // Predicated region
    $region42: #{tpu_custom_call.1} parent=1 // pred_check
      _
    $region43: #{tpu_custom_call.1} parent=1 // pred_check_branch
      %109 = sbr.rel (0) target = $region45
    $region44: #{tpu_custom_call.1} parent=1 // pred_region
      %111 = dma.done [#allocation10], 1024
    $region45: #{tpu_custom_call.1} parent=1 // pred_fallthru
      _
    // Predicated region
    $region46: #{tpu_custom_call.1} parent=1 // pred_check
      _
    $region47: #{tpu_custom_call.1} parent=1 // pred_check_branch
      %113 = sbr.rel (0) target = $region49
    $region48: #{tpu_custom_call.1} parent=1 // pred_region
      %115 = dma.done [#allocation10], 1024
    $region49: #{tpu_custom_call.1} parent=1 // pred_fallthru
      _
    // Predicated region
    $region50: #{tpu_custom_call.1} parent=1 // pred_check
      _
    $region51: #{tpu_custom_call.1} parent=1 // pred_check_branch
      %117 = sbr.rel (0) target = $region53
    $region52: #{tpu_custom_call.1} parent=1 // pred_region
      %119 = dma.done [#allocation13], 128
    $region53: #{tpu_custom_call.1} parent=1 // pred_fallthru
      _
    // Predicated region
    $region54: #{tpu_custom_call.1} parent=1 // pred_check
      _
    $region55: #{tpu_custom_call.1} parent=1 // pred_check_branch
      %121 = sbr.rel (0) target = $region57
    $region56: #{tpu_custom_call.1} parent=1 // pred_region
      %123 = dma.done [#allocation13], 4096
    $region57: #{tpu_custom_call.1} parent=1 // pred_fallthru
      _
    %v125 = vld [vmem:[#allocation7] sm:$0xf]
    %v126 = vld [vmem:[#allocation9] sm:$0xf]
    %v127 = vld [vmem:[#allocation9 + $0x4] sm:$0xf]
    %v128 = vld [vmem:[#allocation9 + $0x8] sm:$0xf]
    %v129 = vld [vmem:[#allocation9 + $0xc] sm:$0xf]
    %v130 = vld [vmem:[#allocation9 + $0x10] sm:$0xf]
    %v131 = vld [vmem:[#allocation9 + $0x14] sm:$0xf]
    %v132 = vld [vmem:[#allocation9 + $0x18] sm:$0xf]
    %v133 = vld [vmem:[#allocation9 + $0x1c] sm:$0xf]
    %v134 = vld [vmem:[#allocation9 + $0x20] sm:$0xf]
    %v135 = vld [vmem:[#allocation9 + $0x24] sm:$0xf]
    %v136 = vld [vmem:[#allocation9 + $0x28] sm:$0xf]
    %v137 = vld [vmem:[#allocation9 + $0x2c] sm:$0xf]
    %v138 = vld [vmem:[#allocation9 + $0x30] sm:$0xf]
    %v139 = vld [vmem:[#allocation9 + $0x34] sm:$0xf]
    %v140 = vld [vmem:[#allocation9 + $0x38] sm:$0xf]
    %v141 = vld [vmem:[#allocation9 + $0x3c] sm:$0xf]
    %v158 = vunpack.c.l.b16 %v126
    %v159 = vunpack.c.l.b16 %v127
    %v160 = vunpack.c.l.b16 %v128
    %v161 = vunpack.c.l.b16 %v129
    %v162 = vunpack.c.l.b16 %v130
    %v163 = vunpack.c.l.b16 %v131
    %v164 = vunpack.c.l.b16 %v132
    %v165 = vunpack.c.l.b16 %v133
    %v166 = vunpack.c.l.b16 %v134
    %v167 = vunpack.c.l.b16 %v135
    %v168 = vunpack.c.l.b16 %v136
    %v169 = vunpack.c.l.b16 %v137
    %v170 = vunpack.c.l.b16 %v138
    %v171 = vunpack.c.l.b16 %v139
    %v172 = vunpack.c.l.b16 %v140
    %v173 = vunpack.c.l.b16 %v141
    %v174 = vpack.c.b16 %v159, %v158
    %v175 = vpack.c.b16 %v161, %v160
    %v176 = vpack.c.b16 %v163, %v162
    %v177 = vpack.c.b16 %v165, %v164
    %v178 = vpack.c.b16 %v167, %v166
    %v179 = vpack.c.b16 %v169, %v168
    %v180 = vpack.c.b16 %v171, %v170
    %v181 = vpack.c.b16 %v173, %v172
    %190 = vmatpush.bf16.msra.mxu0 %v181
    %191 = vmatpush.bf16.msra.mxu0 %v180
    %192 = vmatpush.bf16.msra.mxu0 %v179
    %193 = vmatpush.bf16.msra.mxu0 %v178
    %194 = vmatpush.bf16.msra.mxu0 %v177
    %195 = vmatpush.bf16.msra.mxu0 %v176
    %196 = vmatpush.bf16.msra.mxu0 %v175
    %197 = vmatpush.bf16.msra.mxu0 %v174
    %198 = vmatmul.bf16.gmra.mxu0 %v125
    %v199 = vpop.f32.mrf.mxu0
    %v200 = vadd.f32 0.0, %v199
    %v201 = vpop.f32.mrf.mxu0
    %202 = vdwg.mxu0
    %v203 = vld [vmem:[%s3] sm:$0xf]
    %v204 = vld [vmem:[#allocation11] sm:$0xf]
    %v205 = vld [vmem:[#allocation11 + $0x4] sm:$0xf]
    %v206 = vld [vmem:[#allocation11 + $0x8] sm:$0xf]
    %v207 = vld [vmem:[#allocation11 + $0xc] sm:$0xf]
    %v208 = vld [vmem:[#allocation11 + $0x10] sm:$0xf]
    %v209 = vld [vmem:[#allocation11 + $0x14] sm:$0xf]
    %v210 = vld [vmem:[#allocation11 + $0x18] sm:$0xf]
    %v211 = vld [vmem:[#allocation11 + $0x1c] sm:$0xf]
    %v212 = vld [vmem:[#allocation11 + $0x20] sm:$0xf]
    %v213 = vld [vmem:[#allocation11 + $0x24] sm:$0xf]
    %v214 = vld [vmem:[#allocation11 + $0x28] sm:$0xf]
    %v215 = vld [vmem:[#allocation11 + $0x2c] sm:$0xf]
    %v216 = vld [vmem:[#allocation11 + $0x30] sm:$0xf]
    %v217 = vld [vmem:[#allocation11 + $0x34] sm:$0xf]
    %v218 = vld [vmem:[#allocation11 + $0x38] sm:$0xf]
    %v219 = vld [vmem:[#allocation11 + $0x3c] sm:$0xf]
    %v236 = vunpack.c.l.b16 %v204
    %v237 = vunpack.c.l.b16 %v205
    %v238 = vunpack.c.l.b16 %v206
    %v239 = vunpack.c.l.b16 %v207
    %v240 = vunpack.c.l.b16 %v208
    %v241 = vunpack.c.l.b16 %v209
    %v242 = vunpack.c.l.b16 %v210
    %v243 = vunpack.c.l.b16 %v211
    %v244 = vunpack.c.l.b16 %v212
    %v245 = vunpack.c.l.b16 %v213
    %v246 = vunpack.c.l.b16 %v214
    %v247 = vunpack.c.l.b16 %v215
    %v248 = vunpack.c.l.b16 %v216
    %v249 = vunpack.c.l.b16 %v217
    %v250 = vunpack.c.l.b16 %v218
    %v251 = vunpack.c.l.b16 %v219
    %v252 = vpack.c.b16 %v237, %v236
    %v253 = vpack.c.b16 %v239, %v238
    %v254 = vpack.c.b16 %v241, %v240
    %v255 = vpack.c.b16 %v243, %v242
    %v256 = vpack.c.b16 %v245, %v244
    %v257 = vpack.c.b16 %v247, %v246
    %v258 = vpack.c.b16 %v249, %v248
    %v259 = vpack.c.b16 %v251, %v250
    %268 = vmatpush.bf16.msra.mxu0 %v259
    %269 = vmatpush.bf16.msra.mxu0 %v258
    %270 = vmatpush.bf16.msra.mxu0 %v257
    %271 = vmatpush.bf16.msra.mxu0 %v256
    %272 = vmatpush.bf16.msra.mxu0 %v255
    %273 = vmatpush.bf16.msra.mxu0 %v254
    %274 = vmatpush.bf16.msra.mxu0 %v253
    %275 = vmatpush.bf16.msra.mxu0 %v252
    %276 = vmatmul.bf16.gmra.mxu0 %v203
    %v277 = vpop.f32.mrf.mxu0
    %v278 = vadd.f32 0.0, %v277
    %v279 = vpop.f32.mrf.mxu0
    %280 = vdwg.mxu0
    %v281 = vpack.c.bf16 %v278, %v200
    %v282 = vld [vmem:[#allocation12] sm:$0xf]
    %v283 = vld [vmem:[#allocation12 + $0x4] sm:$0xf]
    %v284 = vld [vmem:[#allocation14] sm:$0xf]
    %v285 = vld [vmem:[#allocation14 + $0x4] sm:$0xf]
    %v286 = vld [vmem:[#allocation14 + $0x8] sm:$0xf]
    %v287 = vld [vmem:[#allocation14 + $0xc] sm:$0xf]
    %v288 = vld [vmem:[#allocation14 + $0x10] sm:$0xf]
    %v289 = vld [vmem:[#allocation14 + $0x14] sm:$0xf]
    %v290 = vld [vmem:[#allocation14 + $0x18] sm:$0xf]
    %v291 = vld [vmem:[#allocation14 + $0x1c] sm:$0xf]
    %v292 = vld [vmem:[#allocation14 + $0x20] sm:$0xf]
    %v293 = vld [vmem:[#allocation14 + $0x24] sm:$0xf]
    %v294 = vld [vmem:[#allocation14 + $0x28] sm:$0xf]
    %v295 = vld [vmem:[#allocation14 + $0x2c] sm:$0xf]
    %v296 = vld [vmem:[#allocation14 + $0x30] sm:$0xf]
    %v297 = vld [vmem:[#allocation14 + $0x34] sm:$0xf]
    %v298 = vld [vmem:[#allocation14 + $0x38] sm:$0xf]
    %v299 = vld [vmem:[#allocation14 + $0x3c] sm:$0xf]
    %v300 = vld [vmem:[%s8] sm:$0x1]
    %v302 = vperm.slane %v300, 0
    %v320 = vunpack.c.l.b16 %v284
    %v321 = vunpack.c.l.b16 %v285
    %v322 = vunpack.c.l.b16 %v286
    %v323 = vunpack.c.l.b16 %v287
    %v324 = vunpack.c.l.b16 %v288
    %v325 = vunpack.c.l.b16 %v289
    %v326 = vunpack.c.l.b16 %v290
    %v327 = vunpack.c.l.b16 %v291
    %v328 = vunpack.c.l.b16 %v292
    %v329 = vunpack.c.l.b16 %v293
    %v330 = vunpack.c.l.b16 %v294
    %v331 = vunpack.c.l.b16 %v295
    %v332 = vunpack.c.l.b16 %v296
    %v333 = vunpack.c.l.b16 %v297
    %v334 = vunpack.c.l.b16 %v298
    %v335 = vunpack.c.l.b16 %v299
    %v336 = vpack.c.b16 %v321, %v320
    %v337 = vpack.c.b16 %v323, %v322
    %v338 = vpack.c.b16 %v325, %v324
    %v339 = vpack.c.b16 %v327, %v326
    %v340 = vpack.c.b16 %v329, %v328
    %v341 = vpack.c.b16 %v331, %v330
    %v342 = vpack.c.b16 %v333, %v332
    %v343 = vpack.c.b16 %v335, %v334
    %352 = vmatpush.bf16.msra.mxu0 %v343
    %353 = vmatpush.bf16.msra.mxu0 %v342
    %354 = vmatpush.bf16.msra.mxu0 %v341
    %355 = vmatpush.bf16.msra.mxu0 %v340
    %356 = vmatpush.bf16.msra.mxu0 %v339
    %357 = vmatpush.bf16.msra.mxu0 %v338
    %358 = vmatpush.bf16.msra.mxu0 %v337
    %359 = vmatpush.bf16.msra.mxu0 %v336
    %360 = vmatmul.bf16.gmra.mxu0 %v281
    %v361 = vpop.f32.mrf.mxu0
    %v362 = vadd.f32 %v302, %v361
    %v363 = vpop.f32.mrf.mxu0
    %v364 = vadd.f32 %v302, %v363
    %365 = vdwg.mxu0
    %v368 = vunpack.c.l.b16 %v282
    %v369 = vunpack.c.l.b16 %v283
    %v370 = vpack.c.b16 %v369, %v368
    %vm371 = vcmask 130048
    %v373 = vsel %vm371, %v370, 0
    %375 = vmatpush.bf16.msra.mxu0 0
    %376 = vmatpush.bf16.msra.mxu0 0
    %377 = vmatpush.bf16.msra.mxu0 0
    %378 = vmatpush.bf16.msra.mxu0 0
    %379 = vmatpush.bf16.msra.mxu0 0
    %380 = vmatpush.bf16.msra.mxu0 0
    %381 = vmatpush.bf16.msra.mxu0 0
    %382 = vmatpush.bf16.msra.mxu0 %v281
    %383 = vmatmul.bf16.gmra.mxu0 %v373
    %v384 = vpop.f32.mrf.mxu0
    %v385 = vadd.f32 0.0, %v384
    %v386 = vpop.f32.mrf.mxu0
    %v387 = vadd.f32 0.0, %v386
    %388 = vdwg.mxu0
    %v389 = vpack.c.bf16 %v387, %v385
    %s390 = scalar_lea.vmem [#allocation14], 64
    %v391 = vld [vmem:[%s390] sm:$0xf]
    %v392 = vld [vmem:[%s390 + $0x4] sm:$0xf]
    %v393 = vld [vmem:[%s390 + $0x8] sm:$0xf]
    %v394 = vld [vmem:[%s390 + $0xc] sm:$0xf]
    %v395 = vld [vmem:[%s390 + $0x10] sm:$0xf]
    %v396 = vld [vmem:[%s390 + $0x14] sm:$0xf]
    %v397 = vld [vmem:[%s390 + $0x18] sm:$0xf]
    %v398 = vld [vmem:[%s390 + $0x1c] sm:$0xf]
    %v399 = vld [vmem:[%s390 + $0x20] sm:$0xf]
    %v400 = vld [vmem:[%s390 + $0x24] sm:$0xf]
    %v401 = vld [vmem:[%s390 + $0x28] sm:$0xf]
    %v402 = vld [vmem:[%s390 + $0x2c] sm:$0xf]
    %v403 = vld [vmem:[%s390 + $0x30] sm:$0xf]
    %v404 = vld [vmem:[%s390 + $0x34] sm:$0xf]
    %v405 = vld [vmem:[%s390 + $0x38] sm:$0xf]
    %v406 = vld [vmem:[%s390 + $0x3c] sm:$0xf]
    %v423 = vunpack.c.l.b16 %v391
    %v424 = vunpack.c.l.b16 %v392
    %v425 = vunpack.c.l.b16 %v393
    %v426 = vunpack.c.l.b16 %v394
    %v427 = vunpack.c.l.b16 %v395
    %v428 = vunpack.c.l.b16 %v396
    %v429 = vunpack.c.l.b16 %v397
    %v430 = vunpack.c.l.b16 %v398
    %v431 = vunpack.c.l.b16 %v399
    %v432 = vunpack.c.l.b16 %v400
    %v433 = vunpack.c.l.b16 %v401
    %v434 = vunpack.c.l.b16 %v402
    %v435 = vunpack.c.l.b16 %v403
    %v436 = vunpack.c.l.b16 %v404
    %v437 = vunpack.c.l.b16 %v405
    %v438 = vunpack.c.l.b16 %v406
    %v439 = vpack.c.b16 %v424, %v423
    %v440 = vpack.c.b16 %v426, %v425
    %v441 = vpack.c.b16 %v428, %v427
    %v442 = vpack.c.b16 %v430, %v429
    %v443 = vpack.c.b16 %v432, %v431
    %v444 = vpack.c.b16 %v434, %v433
    %v445 = vpack.c.b16 %v436, %v435
    %v446 = vpack.c.b16 %v438, %v437
    %455 = vmatpush.bf16.msra.mxu0 %v446
    %456 = vmatpush.bf16.msra.mxu0 %v445
    %457 = vmatpush.bf16.msra.mxu0 %v444
    %458 = vmatpush.bf16.msra.mxu0 %v443
    %459 = vmatpush.bf16.msra.mxu0 %v442
    %460 = vmatpush.bf16.msra.mxu0 %v441
    %461 = vmatpush.bf16.msra.mxu0 %v440
    %462 = vmatpush.bf16.msra.mxu0 %v439
    %463 = vmatmul.bf16.gmra.mxu0 %v389
    %v464 = vpop.f32.mrf.mxu0
    %v465 = vadd.f32 0.0, %v464
    %v466 = vpop.f32.mrf.mxu0
    %v467 = vadd.f32 0.0, %v466
    %468 = vdwg.mxu0
    %v469 = vadd.f32 %v362, %v465
    %v470 = vadd.f32 %v364, %v467
    %471 = vmatpush.bf16.msra.mxu0 0
    %472 = vmatpush.bf16.msra.mxu0 0
    %473 = vmatpush.bf16.msra.mxu0 0
    %474 = vmatpush.bf16.msra.mxu0 0
    %475 = vmatpush.bf16.msra.mxu0 0
    %476 = vmatpush.bf16.msra.mxu0 0
    %477 = vmatpush.bf16.msra.mxu0 0
    %478 = vmatpush.bf16.msra.mxu0 %v389
    %479 = vmatmul.bf16.gmra.mxu0 %v373
    %v480 = vpop.f32.mrf.mxu0
    %v481 = vadd.f32 0.0, %v480
    %v482 = vpop.f32.mrf.mxu0
    %v483 = vadd.f32 0.0, %v482
    %484 = vdwg.mxu0
    %v485 = vpack.c.bf16 %v483, %v481
    %s486 = scalar_lea.vmem [#allocation14], 128
    %v487 = vld [vmem:[%s486] sm:$0xf]
    %v488 = vld [vmem:[%s486 + $0x4] sm:$0xf]
    %v489 = vld [vmem:[%s486 + $0x8] sm:$0xf]
    %v490 = vld [vmem:[%s486 + $0xc] sm:$0xf]
    %v491 = vld [vmem:[%s486 + $0x10] sm:$0xf]
    %v492 = vld [vmem:[%s486 + $0x14] sm:$0xf]
    %v493 = vld [vmem:[%s486 + $0x18] sm:$0xf]
    %v494 = vld [vmem:[%s486 + $0x1c] sm:$0xf]
    %v495 = vld [vmem:[%s486 + $0x20] sm:$0xf]
    %v496 = vld [vmem:[%s486 + $0x24] sm:$0xf]
    %v497 = vld [vmem:[%s486 + $0x28] sm:$0xf]
    %v498 = vld [vmem:[%s486 + $0x2c] sm:$0xf]
    %v499 = vld [vmem:[%s486 + $0x30] sm:$0xf]
    %v500 = vld [vmem:[%s486 + $0x34] sm:$0xf]
    %v501 = vld [vmem:[%s486 + $0x38] sm:$0xf]
    %v502 = vld [vmem:[%s486 + $0x3c] sm:$0xf]
    %v519 = vunpack.c.l.b16 %v487
    %v520 = vunpack.c.l.b16 %v488
    %v521 = vunpack.c.l.b16 %v489
    %v522 = vunpack.c.l.b16 %v490
    %v523 = vunpack.c.l.b16 %v491
    %v524 = vunpack.c.l.b16 %v492
    %v525 = vunpack.c.l.b16 %v493
    %v526 = vunpack.c.l.b16 %v494
    %v527 = vunpack.c.l.b16 %v495
    %v528 = vunpack.c.l.b16 %v496
    %v529 = vunpack.c.l.b16 %v497
    %v530 = vunpack.c.l.b16 %v498
    %v531 = vunpack.c.l.b16 %v499
    %v532 = vunpack.c.l.b16 %v500
    %v533 = vunpack.c.l.b16 %v501
    %v534 = vunpack.c.l.b16 %v502
    %v535 = vpack.c.b16 %v520, %v519
    %v536 = vpack.c.b16 %v522, %v521
    %v537 = vpack.c.b16 %v524, %v523
    %v538 = vpack.c.b16 %v526, %v525
    %v539 = vpack.c.b16 %v528, %v527
    %v540 = vpack.c.b16 %v530, %v529
    %v541 = vpack.c.b16 %v532, %v531
    %v542 = vpack.c.b16 %v534, %v533
    %551 = vmatpush.bf16.msra.mxu0 %v542
    %552 = vmatpush.bf16.msra.mxu0 %v541
    %553 = vmatpush.bf16.msra.mxu0 %v540
    %554 = vmatpush.bf16.msra.mxu0 %v539
    %555 = vmatpush.bf16.msra.mxu0 %v538
    %556 = vmatpush.bf16.msra.mxu0 %v537
    %557 = vmatpush.bf16.msra.mxu0 %v536
    %558 = vmatpush.bf16.msra.mxu0 %v535
    %559 = vmatmul.bf16.gmra.mxu0 %v485
    %v560 = vpop.f32.mrf.mxu0
    %v561 = vadd.f32 0.0, %v560
    %v562 = vpop.f32.mrf.mxu0
    %v563 = vadd.f32 0.0, %v562
    %564 = vdwg.mxu0
    %v565 = vadd.f32 %v469, %v561
    %v566 = vadd.f32 %v470, %v563
    %567 = vmatpush.bf16.msra.mxu0 0
    %568 = vmatpush.bf16.msra.mxu0 0
    %569 = vmatpush.bf16.msra.mxu0 0
    %570 = vmatpush.bf16.msra.mxu0 0
    %571 = vmatpush.bf16.msra.mxu0 0
    %572 = vmatpush.bf16.msra.mxu0 0
    %573 = vmatpush.bf16.msra.mxu0 0
    %574 = vmatpush.bf16.msra.mxu0 %v485
    %575 = vmatmul.bf16.gmra.mxu0 %v373
    %v576 = vpop.f32.mrf.mxu0
    %v577 = vadd.f32 0.0, %v576
    %v578 = vpop.f32.mrf.mxu0
    %v579 = vadd.f32 0.0, %v578
    %580 = vdwg.mxu0
    %v581 = vpack.c.bf16 %v579, %v577
    %s582 = scalar_lea.vmem [#allocation14], 192
    %v583 = vld [vmem:[%s582] sm:$0xf]
    %v584 = vld [vmem:[%s582 + $0x4] sm:$0xf]
    %v585 = vld [vmem:[%s582 + $0x8] sm:$0xf]
    %v586 = vld [vmem:[%s582 + $0xc] sm:$0xf]
    %v587 = vld [vmem:[%s582 + $0x10] sm:$0xf]
    %v588 = vld [vmem:[%s582 + $0x14] sm:$0xf]
    %v589 = vld [vmem:[%s582 + $0x18] sm:$0xf]
    %v590 = vld [vmem:[%s582 + $0x1c] sm:$0xf]
    %v591 = vld [vmem:[%s582 + $0x20] sm:$0xf]
    %v592 = vld [vmem:[%s582 + $0x24] sm:$0xf]
    %v593 = vld [vmem:[%s582 + $0x28] sm:$0xf]
    %v594 = vld [vmem:[%s582 + $0x2c] sm:$0xf]
    %v595 = vld [vmem:[%s582 + $0x30] sm:$0xf]
    %v596 = vld [vmem:[%s582 + $0x34] sm:$0xf]
    %v597 = vld [vmem:[%s582 + $0x38] sm:$0xf]
    %v598 = vld [vmem:[%s582 + $0x3c] sm:$0xf]
    %v615 = vunpack.c.l.b16 %v583
    %v616 = vunpack.c.l.b16 %v584
    %v617 = vunpack.c.l.b16 %v585
    %v618 = vunpack.c.l.b16 %v586
    %v619 = vunpack.c.l.b16 %v587
    %v620 = vunpack.c.l.b16 %v588
    %v621 = vunpack.c.l.b16 %v589
    %v622 = vunpack.c.l.b16 %v590
    %v623 = vunpack.c.l.b16 %v591
    %v624 = vunpack.c.l.b16 %v592
    %v625 = vunpack.c.l.b16 %v593
    %v626 = vunpack.c.l.b16 %v594
    %v627 = vunpack.c.l.b16 %v595
    %v628 = vunpack.c.l.b16 %v596
    %v629 = vunpack.c.l.b16 %v597
    %v630 = vunpack.c.l.b16 %v598
    %v631 = vpack.c.b16 %v616, %v615
    %v632 = vpack.c.b16 %v618, %v617
    %v633 = vpack.c.b16 %v620, %v619
    %v634 = vpack.c.b16 %v622, %v621
    %v635 = vpack.c.b16 %v624, %v623
    %v636 = vpack.c.b16 %v626, %v625
    %v637 = vpack.c.b16 %v628, %v627
    %v638 = vpack.c.b16 %v630, %v629
    %647 = vmatpush.bf16.msra.mxu0 %v638
    %648 = vmatpush.bf16.msra.mxu0 %v637
    %649 = vmatpush.bf16.msra.mxu0 %v636
    %650 = vmatpush.bf16.msra.mxu0 %v635
    %651 = vmatpush.bf16.msra.mxu0 %v634
    %652 = vmatpush.bf16.msra.mxu0 %v633
    %653 = vmatpush.bf16.msra.mxu0 %v632
    %654 = vmatpush.bf16.msra.mxu0 %v631
    %655 = vmatmul.bf16.gmra.mxu0 %v581
    %v656 = vpop.f32.mrf.mxu0
    %v657 = vadd.f32 0.0, %v656
    %v658 = vpop.f32.mrf.mxu0
    %v659 = vadd.f32 0.0, %v658
    %660 = vdwg.mxu0
    %v661 = vadd.f32 %v565, %v657
    %v662 = vadd.f32 %v566, %v659
    %663 = vst [vmem:[#allocation2] sm:$0xff] %v661
    %664 = vst [vmem:[#allocation2 + $0x8] sm:$0xff] %v662
    %v665 = vld [vmem:[%s9] sm:$0x1]
    %s666 = scalar_lea.vmem %s9, 1
    %v667 = vld [vmem:[%s666] sm:$0x1]
    %s668 = scalar_lea.vmem %s9, 2
    %v669 = vld [vmem:[%s668] sm:$0x1]
    %s670 = sld [smem:[#allocation6]]
    %s671 = sld [smem:[#allocation4]]
    %s672 = sld [smem:[#allocation5]]
    %s673 = scalar_lea.vmem [#allocation2], %s671
    %v674 = vld [vmem:[%s673] sm:$0x1]
    %s675 = scalar_lea.vmem [#allocation2], %s672
    %v676 = vld [vmem:[%s675] sm:$0x1]
    %v677 = vmul.f32 %v674, %v665
    %v678 = vmul.f32 %v676, %v667
    %v679 = vadd.f32 %v677, %v678
    %v680 = vmul.f32 %v674, %v676
    %v681 = vmul.f32 %v680, %v669
    %v682 = vadd.f32 %v679, %v681
    %vm683 = vcmask 1040384
    %v684 = vsel %vm683, %v682, 0.0
    %685 = vadd.xlane.f32.xlu0 %v684
    %v686 = vpop.xlane.xlu0 %685
    %v687 = vstv %s670
    %v688 = vadd.f32 %v686, %v687
    %v689 = vxor.u32 %v688, 2147483648
    %v690 = vmul.f32 %v689, 1.442695
    %v691 = vpow.pop %v690
    %v692 = vadd.f32 %v691, 1.0
    %v693 = vrcp.pop %v692
    %v694 = vmul.f32 %v692, %v693
    %v695 = vsub.f32 1.0, %v694
    %v696 = vmul.f32 %v693, %v695
    %v697 = vadd.f32 %v693, %v696
    %vm698 = vweird.f32 %v692
    %vm699 = vweird.f32 %v693
    %vm700 = vmor %vm698, %vm699
    %v701 = vsel %vm700, %v693, %v697
    %v702 = vand.u32 2147483647, %v692
    %vm703 = vcmp.eq.f32.partialorder %v702, 8.507059e+37
    %v704 = vand.u32 %v692, 2147483648
    %v705 = vor.u32 1.1754944e-38, %v704
    %v706 = vsel %vm703, %v705, %v701
    %v707 = vmul.f32 1.0, %v706
    %vm708 = vcmask 0
    %709 = vst.msk [vmem:[%s11] sm:$0x1] %vm708, %v707
    %s710 = sld [smem:[#allocation4 + $0x1]]
    %s711 = sld [smem:[#allocation5 + $0x1]]
    %s712 = scalar_lea.vmem [#allocation2], %s710
    %v713 = vld [vmem:[%s712] sm:$0x1]
    %s714 = scalar_lea.vmem [#allocation2], %s711
    %v715 = vld [vmem:[%s714] sm:$0x1]
    %v716 = vmul.f32 %v713, %v665
    %v717 = vmul.f32 %v715, %v667
    %v718 = vadd.f32 %v716, %v717
    %v719 = vmul.f32 %v713, %v715
    %v720 = vmul.f32 %v719, %v669
    %v721 = vadd.f32 %v718, %v720
    %v722 = vsel %vm683, %v721, 0.0
    %723 = vadd.xlane.f32.xlu0 %v722
    %v724 = vpop.xlane.xlu0 %723
    %v725 = vadd.f32 %v724, %v687
    %v726 = vxor.u32 %v725, 2147483648
    %v727 = vmul.f32 %v726, 1.442695
    %v728 = vpow.pop %v727
    %v729 = vadd.f32 %v728, 1.0
    %v730 = vrcp.pop %v729
    %v731 = vmul.f32 %v729, %v730
    %v732 = vsub.f32 1.0, %v731
    %v733 = vmul.f32 %v730, %v732
    %v734 = vadd.f32 %v730, %v733
    %vm735 = vweird.f32 %v729
    %vm736 = vweird.f32 %v730
    %vm737 = vmor %vm735, %vm736
    %v738 = vsel %vm737, %v730, %v734
    %v739 = vand.u32 2147483647, %v729
    %vm740 = vcmp.eq.f32.partialorder %v739, 8.507059e+37
    %v741 = vand.u32 %v729, 2147483648
    %v742 = vor.u32 1.1754944e-38, %v741
    %v743 = vsel %vm740, %v742, %v738
    %v744 = vmul.f32 1.0, %v743
    %745 = vst.msk [vmem:[%s11 + $0x1] sm:$0x1] %vm708, %v744
    %s746 = sld [smem:[#allocation4 + $0x2]]
    %s747 = sld [smem:[#allocation5 + $0x2]]
    %s748 = scalar_lea.vmem [#allocation2], %s746
    %v749 = vld [vmem:[%s748] sm:$0x1]
    %s750 = scalar_lea.vmem [#allocation2], %s747
    %v751 = vld [vmem:[%s750] sm:$0x1]
    %v752 = vmul.f32 %v749, %v665
    %v753 = vmul.f32 %v751, %v667
    %v754 = vadd.f32 %v752, %v753
    %v755 = vmul.f32 %v749, %v751
    %v756 = vmul.f32 %v755, %v669
    %v757 = vadd.f32 %v754, %v756
    %v758 = vsel %vm683, %v757, 0.0
    %759 = vadd.xlane.f32.xlu0 %v758
    %v760 = vpop.xlane.xlu0 %759
    %v761 = vadd.f32 %v760, %v687
    %v762 = vxor.u32 %v761, 2147483648
    %v763 = vmul.f32 %v762, 1.442695
    %v764 = vpow.pop %v763
    %v765 = vadd.f32 %v764, 1.0
    %v766 = vrcp.pop %v765
    %v767 = vmul.f32 %v765, %v766
    %v768 = vsub.f32 1.0, %v767
    %v769 = vmul.f32 %v766, %v768
    %v770 = vadd.f32 %v766, %v769
    %vm771 = vweird.f32 %v765
    %vm772 = vweird.f32 %v766
    %vm773 = vmor %vm771, %vm772
    %v774 = vsel %vm773, %v766, %v770
    %v775 = vand.u32 2147483647, %v765
    %vm776 = vcmp.eq.f32.partialorder %v775, 8.507059e+37
    %v777 = vand.u32 %v765, 2147483648
    %v778 = vor.u32 1.1754944e-38, %v777
    %v779 = vsel %vm776, %v778, %v774
    %v780 = vmul.f32 1.0, %v779
    %781 = vst.msk [vmem:[%s11 + $0x2] sm:$0x1] %vm708, %v780
    %s782 = sld [smem:[#allocation4 + $0x3]]
    %s783 = sld [smem:[#allocation5 + $0x3]]
    %s784 = scalar_lea.vmem [#allocation2], %s782
    %v785 = vld [vmem:[%s784] sm:$0x1]
    %s786 = scalar_lea.vmem [#allocation2], %s783
    %v787 = vld [vmem:[%s786] sm:$0x1]
    %v788 = vmul.f32 %v785, %v665
    %v789 = vmul.f32 %v787, %v667
    %v790 = vadd.f32 %v788, %v789
    %v791 = vmul.f32 %v785, %v787
    %v792 = vmul.f32 %v791, %v669
    %v793 = vadd.f32 %v790, %v792
    %v794 = vsel %vm683, %v793, 0.0
    %795 = vadd.xlane.f32.xlu0 %v794
    %v796 = vpop.xlane.xlu0 %795
    %v797 = vadd.f32 %v796, %v687
    %v798 = vxor.u32 %v797, 2147483648
    %v799 = vmul.f32 %v798, 1.442695
    %v800 = vpow.pop %v799
    %v801 = vadd.f32 %v800, 1.0
    %v802 = vrcp.pop %v801
    %v803 = vmul.f32 %v801, %v802
    %v804 = vsub.f32 1.0, %v803
    %v805 = vmul.f32 %v802, %v804
    %v806 = vadd.f32 %v802, %v805
    %vm807 = vweird.f32 %v801
    %vm808 = vweird.f32 %v802
    %vm809 = vmor %vm807, %vm808
    %v810 = vsel %vm809, %v802, %v806
    %v811 = vand.u32 2147483647, %v801
    %vm812 = vcmp.eq.f32.partialorder %v811, 8.507059e+37
    %v813 = vand.u32 %v801, 2147483648
    %v814 = vor.u32 1.1754944e-38, %v813
    %v815 = vsel %vm812, %v814, %v810
    %v816 = vmul.f32 1.0, %v815
    %817 = vst.msk [vmem:[%s11 + $0x3] sm:$0x1] %vm708, %v816
    %s818 = sld [smem:[#allocation4 + $0x4]]
    %s819 = sld [smem:[#allocation5 + $0x4]]
    %s820 = scalar_lea.vmem [#allocation2], %s818
    %v821 = vld [vmem:[%s820] sm:$0x1]
    %s822 = scalar_lea.vmem [#allocation2], %s819
    %v823 = vld [vmem:[%s822] sm:$0x1]
    %v824 = vmul.f32 %v821, %v665
    %v825 = vmul.f32 %v823, %v667
    %v826 = vadd.f32 %v824, %v825
    %v827 = vmul.f32 %v821, %v823
    %v828 = vmul.f32 %v827, %v669
    %v829 = vadd.f32 %v826, %v828
    %v830 = vsel %vm683, %v829, 0.0
    %831 = vadd.xlane.f32.xlu0 %v830
    %v832 = vpop.xlane.xlu0 %831
    %v833 = vadd.f32 %v832, %v687
    %v834 = vxor.u32 %v833, 2147483648
    %v835 = vmul.f32 %v834, 1.442695
    %v836 = vpow.pop %v835
    %v837 = vadd.f32 %v836, 1.0
    %v838 = vrcp.pop %v837
    %v839 = vmul.f32 %v837, %v838
    %v840 = vsub.f32 1.0, %v839
    %v841 = vmul.f32 %v838, %v840
    %v842 = vadd.f32 %v838, %v841
    %vm843 = vweird.f32 %v837
    %vm844 = vweird.f32 %v838
    %vm845 = vmor %vm843, %vm844
    %v846 = vsel %vm845, %v838, %v842
    %v847 = vand.u32 2147483647, %v837
    %vm848 = vcmp.eq.f32.partialorder %v847, 8.507059e+37
    %v849 = vand.u32 %v837, 2147483648
    %v850 = vor.u32 1.1754944e-38, %v849
    %v851 = vsel %vm848, %v850, %v846
    %v852 = vmul.f32 1.0, %v851
    %853 = vst.msk [vmem:[%s11 + $0x4] sm:$0x1] %vm708, %v852
    %s854 = sld [smem:[#allocation4 + $0x5]]
    %s855 = sld [smem:[#allocation5 + $0x5]]
    %s856 = scalar_lea.vmem [#allocation2], %s854
    %v857 = vld [vmem:[%s856] sm:$0x1]
    %s858 = scalar_lea.vmem [#allocation2], %s855
    %v859 = vld [vmem:[%s858] sm:$0x1]
    %v860 = vmul.f32 %v857, %v665
    %v861 = vmul.f32 %v859, %v667
    %v862 = vadd.f32 %v860, %v861
    %v863 = vmul.f32 %v857, %v859
    %v864 = vmul.f32 %v863, %v669
    %v865 = vadd.f32 %v862, %v864
    %v866 = vsel %vm683, %v865, 0.0
    %867 = vadd.xlane.f32.xlu0 %v866
    %v868 = vpop.xlane.xlu0 %867
    %v869 = vadd.f32 %v868, %v687
    %v870 = vxor.u32 %v869, 2147483648
    %v871 = vmul.f32 %v870, 1.442695
    %v872 = vpow.pop %v871
    %v873 = vadd.f32 %v872, 1.0
    %v874 = vrcp.pop %v873
    %v875 = vmul.f32 %v873, %v874
    %v876 = vsub.f32 1.0, %v875
    %v877 = vmul.f32 %v874, %v876
    %v878 = vadd.f32 %v874, %v877
    %vm879 = vweird.f32 %v873
    %vm880 = vweird.f32 %v874
    %vm881 = vmor %vm879, %vm880
    %v882 = vsel %vm881, %v874, %v878
    %v883 = vand.u32 2147483647, %v873
    %vm884 = vcmp.eq.f32.partialorder %v883, 8.507059e+37
    %v885 = vand.u32 %v873, 2147483648
    %v886 = vor.u32 1.1754944e-38, %v885
    %v887 = vsel %vm884, %v886, %v882
    %v888 = vmul.f32 1.0, %v887
    %889 = vst.msk [vmem:[%s11 + $0x5] sm:$0x1] %vm708, %v888
    // Predicated region
    $region58: #{tpu_custom_call.1} parent=1 // pred_check
      _
    $region59: #{tpu_custom_call.1} parent=1 // pred_check_branch
      %891 = sbr.rel (0) target = $region61
    $region60: #{tpu_custom_call.1} parent=1 // pred_region
      _
    $region61: #{tpu_custom_call.1} parent=1 // pred_fallthru
      _
    // Predicated region
    $region62: #{tpu_custom_call.1} parent=1 // pred_check
      _
    $region63: #{tpu_custom_call.1} parent=1 // pred_check_branch
      %893 = sbr.rel (0) target = $region65
    $region64: #{tpu_custom_call.1} parent=1 // pred_region
      _
    $region65: #{tpu_custom_call.1} parent=1 // pred_fallthru
      _
    %894 = vsyncpa [#allocation8], 1
    %895 = vsyncpa [#allocation10], 1
    %896 = vsyncpa [#allocation13], 1

</llo_original>
